<compile_context>
chip_gen: v7x
topology: tpu7x:2x2x1
jax: 0.10.0
libtpu: 0.0.40
codegen_flags: <defaults>
</compile_context>

<pallas_src>
import jax
import jax.numpy as jnp
from jax.experimental import pallas as pl
from jax.experimental.pallas import tpu as pltpu

_LANES = 128


def _cdiv(a, b):
    return -(-a // b)


def _round_up(a, b):
    return _cdiv(a, b) * b


def _sublane_granule(itemsize):
    # Sub-32-bit dtypes pack along sublanes: one bf16 vreg is [16,128], int8 [32,128].
    return {4: 8, 2: 16, 1: 32}.get(int(itemsize), 8)


def _detect_tensorcores():
    # v7x has 2 TensorCores per chip; v5e/v6e have 1.  Be conservative: only
    # report >1 when the runtime explicitly exposes it (on v7x you can also
    # just pass num_cores=2 to dice_loss).
    try:
        v = getattr(jax.devices()[0], "num_cores", None)
        if isinstance(v, int) and v >= 1:
            return min(int(v), 2)
    except Exception:
        pass
    return 1


def _reference_dice_loss(inp, target):
    """Plain-JAX reference; also the tiny-input fallback path."""
    n = target.shape[0]
    x = inp.reshape(n, -1).astype(jnp.float32)
    t = target.reshape(n, -1).astype(jnp.float32)
    smooth = jnp.float32(1.0)
    inter = jnp.sum(x * t, axis=1)
    loss = 2.0 * (inter + smooth) / (jnp.sum(x, axis=1) + jnp.sum(t, axis=1) + smooth)
    return (1.0 - jnp.sum(loss) / n).astype(jnp.float32)


def dice_loss(inp, target, *, block_budget_bytes=4 << 20, tile_rows=None,
              batch_rows=None, num_cores=None, force_pallas=False):
    """Dice loss matching PyTorch DiceLoss.forward (returns a scalar float32).

    inp / target: arrays with identical leading batch dim N; everything past
    the batch dim is flattened.  Inputs keep their dtype through the DMA
    (f32 / bf16 / int all fine); accumulation is always float32.
    """
    n = target.shape[0]
    x = inp.reshape(n, -1)
    t = target.reshape(n, -1)
    d = x.shape[1]
    assert t.shape[1] == d, "input/target must flatten to the same per-sample size"

    x_isize = jnp.dtype(x.dtype).itemsize
    t_isize = jnp.dtype(t.dtype).itemsize
    itemsize = max(x_isize, t_isize)
    sub = max(_sublane_granule(x_isize), _sublane_granule(t_isize))

    # ---- batch block: keeps per-step VMEM bounded for any N ----------------
    if batch_rows is not None:
        nb = int(max(1, min(n, batch_rows)))
    else:
        nb = int(min(n, 256))
    if nb < n:
        # The (1, nb, 128) accumulator output block needs a sublane-aligned
        # middle dim (second-to-last block dim must be a multiple of 8).
        nb = max(8, (nb // 8) * 8)
        if nb >= n:
            nb = n

    # ---- rows of 128 lanes per sample --------------------------------------
    # Pad only to the next multiple of 128 (exact: zeros add nothing to the
    # sums), never to a multiple of tile_rows*128.
    d_pad = max(_round_up(d, _LANES), sub * _LANES)
    r = d_pad // _LANES

    # ---- tile rows: dtype-granular, byte-budgeted, never larger than r -----
    tr_budget = max(sub, (block_budget_bytes // (nb * _LANES * itemsize)) // sub * sub)
    tr = min((r // sub) * sub, tr_budget)
    if tile_rows is not None:
        tr = min(tr, max(sub, (int(tile_rows) // sub) * sub))
    tr = max(sub, int(tr))

    n_reduce_steps = _cdiv(r, tr)
    n_batch_blocks = _cdiv(n, nb)

    if not force_pallas and n_reduce_steps == 1 and n_batch_blocks == 1:
        # Single grid step: no pipelining to exploit; XLA fuses this fine.
        return _reference_dice_loss(inp, target)

    if d_pad != d:
        x = jnp.pad(x, ((0, 0), (0, d_pad - d)))
        t = jnp.pad(t, ((0, 0), (0, d_pad - d)))
    x = x.reshape(n, r, _LANES)
    t = t.reshape(n, r, _LANES)

    # ---- optional 2-TensorCore split (v7x); no-op on v5e/v6e ----------------
    cores = int(num_cores) if num_cores is not None else _detect_tensorcores()
    n_split = cores if (cores > 1 and n_reduce_steps >= 2 * cores) else 1
    tps = _cdiv(n_reduce_steps, n_split)      # reduce steps per core-split

    last_block = n_reduce_steps - 1
    clamp_steps = (n_split * tps != n_reduce_steps)   # odd split: tail steps OOB
    needs_mask = (r % tr != 0) or clamp_steps          # ragged tail rows exist

    def in_map(c, b, i):
        step = c * tps + i
        if clamp_steps:
            # Never issue a DMA past the array; the kernel masks those
            # (fully out-of-range) tail steps to zero anyway.
            step = jnp.minimum(step, last_block)
        return (b, step, 0)

    def out_map(c, b, i):
        return (c, b, 0)

    def kernel(x_ref, t_ref, inter_ref, den_ref):
        c = pl.program_id(0)
        i = pl.program_id(2)

        @pl.when(i == 0)
        def _():
            inter_ref[...] = jnp.zeros_like(inter_ref)
            den_ref[...] = jnp.zeros_like(den_ref)

        xv = x_ref[...].astype(jnp.float32)
        tv = t_ref[...].astype(jnp.float32)

        if needs_mask:
            # Mask ragged tail rows of the reduction axis (and whole
            # out-of-range steps of an uneven core split) in-kernel instead
            # of padding in the wrapper.
            nvalid = r - (c * tps + i) * tr
            rows = jax.lax.broadcasted_iota(jnp.int32, (1, tr, _LANES), 1)
            valid = rows < nvalid
            xv = jnp.where(valid, xv, 0.0)
            tv = jnp.where(valid, tv, 0.0)

        # Per-sample, per-lane partial sums; lanes reduced in the epilogue.
        inter_ref[...] += jnp.sum(xv * tv, axis=1)[None]     # (1, nb, 128)
        den_ref[...] += jnp.sum(xv + tv, axis=1)[None]       # fused sum(x)+sum(t)

    if n_split > 1:
        dim_sem = (pltpu.CORE_PARALLEL, pltpu.PARALLEL, pltpu.ARBITRARY)
    else:
        dim_sem = ("parallel", "parallel", "arbitrary")

    cp_kwargs = dict(dimension_semantics=dim_sem)
    block_in_bytes = nb * tr * _LANES * (x_isize + t_isize)
    out_block_bytes = 2 * nb * _LANES * 4
    vmem_need = 2 * block_in_bytes + 2 * out_block_bytes     # double-buffered
    if vmem_need > (12 << 20):
        # Bigger-than-default streaming blocks: raise the scoped-VMEM limit
        # (v5e's default is only 16 MiB); stay well under v7x's 64 MiB physical.
        cp_kwargs["vmem_limit_bytes"] = int(min(48 << 20, vmem_need + (8 << 20)))

    inter_p, den_p = pl.pallas_call(
        kernel,
        out_shape=(
            jax.ShapeDtypeStruct((n_split, n, _LANES), jnp.float32),
            jax.ShapeDtypeStruct((n_split, n, _LANES), jnp.float32),
        ),
        grid_spec=pltpu.PrefetchScalarGridSpec(
            num_scalar_prefetch=0,
            grid=(n_split, n_batch_blocks, tps),
            in_specs=[
                pl.BlockSpec((nb, tr, _LANES), in_map),
                pl.BlockSpec((nb, tr, _LANES), in_map),
            ],
            out_specs=(
                pl.BlockSpec((1, nb, _LANES), out_map),
                pl.BlockSpec((1, nb, _LANES), out_map),
            ),
        ),
        compiler_params=pltpu.CompilerParams(**cp_kwargs),
    )(x, t)

    # Tiny scalar epilogue in plain JAX: combine partials, apply smooth, 1 - mean.
    smooth = jnp.float32(1.0)
    inter = jnp.sum(inter_p, axis=(0, 2))    # (N,)
    den = jnp.sum(den_p, axis=(0, 2))        # (N,)
    per_sample = 2.0 * (inter + smooth) / (den + smooth)
    return (1.0 - jnp.sum(per_sample) / jnp.float32(n)).astype(jnp.float32)


if __name__ == "__main__":
    key = jax.random.PRNGKey(0)
    ks = jax.random.split(key, 10)

    def check(out, x, t, tol=1e-5):
        out = jax.block_until_ready(out)
        ref = jax.block_until_ready(_reference_dice_loss(x, t))
        assert jnp.allclose(out, ref, atol=tol, rtol=tol), (float(out), float(ref))

    # 1) Spec-consistent small shape (N=2, C=4, 16x16).  force_pallas exercises
    #    the kernel even though the heuristic would pick the plain-JAX fallback
    #    for a single-step grid; the second call checks the fallback path.
    x1 = jax.random.uniform(ks[0], (2, 4, 16, 16), dtype=jnp.float32)
    t1 = (jax.random.uniform(ks[1], (2, 4, 16, 16)) > 0.5).astype(jnp.float32)
    check(dice_loss(x1, t1, force_pallas=True), x1, t1)
    check(dice_loss(x1, t1), x1, t1)

    # 2) Multi-step reduction with a ragged tail (r=18 rows, tile_rows=8):
    #    exercises the in-kernel tail masking (no wrapper-side padding).
    x2 = jax.random.uniform(ks[2], (2, 4, 24, 24), dtype=jnp.float32)
    t2 = (jax.random.uniform(ks[3], (2, 4, 24, 24)) > 0.5).astype(jnp.float32)
    check(dice_loss(x2, t2, tile_rows=8), x2, t2)

    # 3) Batch tiling with a partial final batch block (N=10, blocks of 8).
    x3 = jax.random.uniform(ks[4], (10, 1, 32, 32), dtype=jnp.float32)
    t3 = (jax.random.uniform(ks[5], (10, 1, 32, 32)) > 0.5).astype(jnp.float32)
    check(dice_loss(x3, t3, batch_rows=8, force_pallas=True), x3, t3)

    # 4) D not a multiple of 128: pad-to-next-128 path only (969 -> 1024).
    x4 = jax.random.uniform(ks[6], (2, 3, 17, 19), dtype=jnp.float32)
    t4 = (jax.random.uniform(ks[7], (2, 3, 17, 19)) > 0.5).astype(jnp.float32)
    check(dice_loss(x4, t4, force_pallas=True), x4, t4)

    # 5) bf16 input path (16-row sublane granularity).
    x5 = jax.random.uniform(ks[8], (2, 4, 32, 16), dtype=jnp.float32).astype(jnp.bfloat16)
    t5 = (jax.random.uniform(ks[9], (2, 4, 32, 16)) > 0.5).astype(jnp.float32)
    check(dice_loss(x5, t5, force_pallas=True), x5, t5, tol=1e-4)

    print("KERNEL_OK")
</pallas_src>

<mosaic_0001>
module attributes {stable_mosaic.version = 11 : i64} {
  func.func @kernel(%arg0: i32, %arg1: i32, %arg2: i32, %arg3: memref<2x8x128xf32, #tpu.memory_space<vmem>>, %arg4: memref<2x8x128xf32, #tpu.memory_space<vmem>>, %arg5: memref<1x2x128xf32, #tpu.memory_space<vmem>>, %arg6: memref<1x2x128xf32, #tpu.memory_space<vmem>>) attributes {dimension_semantics = [#tpu.dimension_semantics<parallel>, #tpu.dimension_semantics<parallel>, #tpu.dimension_semantics<arbitrary>], iteration_bounds = array<i64: 1, 1, 1>, scalar_prefetch = 0 : i64, scratch_operands = 0 : i64, tpu.core_type = #tpu.core_type<tc>, window_params = [{transform_indices = @transform_0, window_bounds = array<i64: 2, 8, 128>}, {transform_indices = @transform_1, window_bounds = array<i64: 2, 8, 128>}, {transform_indices = @transform_2, window_bounds = array<i64: 1, 2, 128>}, {transform_indices = @transform_3, window_bounds = array<i64: 1, 2, 128>}]} {
    %c0_i32 = arith.constant 0 : i32
    %0 = arith.cmpi eq, %arg2, %c0_i32 : i32
    %1 = arith.extui %0 : i1 to i32
    %c0_i32_0 = arith.constant 0 : i32
    %2 = arith.cmpi ne, %1, %c0_i32_0 : i32
    scf.if %2 {
      %cst_19 = arith.constant 0.000000e+00 : f32
      %17 = vector.broadcast %cst_19 : f32 to vector<1x2x128xf32>
      %c0_20 = arith.constant 0 : index
      %c0_21 = arith.constant 0 : index
      %c0_22 = arith.constant 0 : index
      %18 = vector.load %arg5[%c0_20, %c0_21, %c0_22] : memref<1x2x128xf32, #tpu.memory_space<vmem>>, vector<1x2x128xf32>
      tpu.vector_store %arg5[%c0_20, %c0_21, %c0_22], %17 {strides = array<i32>} : memref<1x2x128xf32, #tpu.memory_space<vmem>>, vector<1x2x128xf32>,
      %cst_23 = arith.constant 0.000000e+00 : f32
      %19 = vector.broadcast %cst_23 : f32 to vector<1x2x128xf32>
      %c0_24 = arith.constant 0 : index
      %c0_25 = arith.constant 0 : index
      %c0_26 = arith.constant 0 : index
      %20 = vector.load %arg6[%c0_24, %c0_25, %c0_26] : memref<1x2x128xf32, #tpu.memory_space<vmem>>, vector<1x2x128xf32>
      tpu.vector_store %arg6[%c0_24, %c0_25, %c0_26], %19 {strides = array<i32>} : memref<1x2x128xf32, #tpu.memory_space<vmem>>, vector<1x2x128xf32>,
    } else {
    }
    %c0 = arith.constant 0 : index
    %c0_1 = arith.constant 0 : index
    %c0_2 = arith.constant 0 : index
    %3 = vector.load %arg3[%c0, %c0_1, %c0_2] : memref<2x8x128xf32, #tpu.memory_space<vmem>>, vector<2x8x128xf32>
    %c0_3 = arith.constant 0 : index
    %c0_4 = arith.constant 0 : index
    %c0_5 = arith.constant 0 : index
    %4 = vector.load %arg4[%c0_3, %c0_4, %c0_5] : memref<2x8x128xf32, #tpu.memory_space<vmem>>, vector<2x8x128xf32>
    %c0_6 = arith.constant 0 : index
    %c0_7 = arith.constant 0 : index
    %c0_8 = arith.constant 0 : index
    %5 = vector.load %arg5[%c0_6, %c0_7, %c0_8] : memref<1x2x128xf32, #tpu.memory_space<vmem>>, vector<1x2x128xf32>
    %6 = arith.mulf %3, %4 : vector<2x8x128xf32>
    %cst = arith.constant dense<0.000000e+00> : vector<2x128xf32>
    %7 = vector.multi_reduction <add>, %6, %cst [1] : vector<2x8x128xf32> to vector<2x128xf32>
    %8 = vector.shape_cast %7 : vector<2x128xf32> to vector<1x2x128xf32>
    %9 = arith.addf %5, %8 : vector<1x2x128xf32>
    %c0_9 = arith.constant 0 : index
    %c0_10 = arith.constant 0 : index
    %c0_11 = arith.constant 0 : index
    %10 = vector.load %arg5[%c0_9, %c0_10, %c0_11] : memref<1x2x128xf32, #tpu.memory_space<vmem>>, vector<1x2x128xf32>
    tpu.vector_store %arg5[%c0_9, %c0_10, %c0_11], %9 {strides = array<i32>} : memref<1x2x128xf32, #tpu.memory_space<vmem>>, vector<1x2x128xf32>,
    %c0_12 = arith.constant 0 : index
    %c0_13 = arith.constant 0 : index
    %c0_14 = arith.constant 0 : index
    %11 = vector.load %arg6[%c0_12, %c0_13, %c0_14] : memref<1x2x128xf32, #tpu.memory_space<vmem>>, vector<1x2x128xf32>
    %12 = arith.addf %3, %4 : vector<2x8x128xf32>
    %cst_15 = arith.constant dense<0.000000e+00> : vector<2x128xf32>
    %13 = vector.multi_reduction <add>, %12, %cst_15 [1] : vector<2x8x128xf32> to vector<2x128xf32>
    %14 = vector.shape_cast %13 : vector<2x128xf32> to vector<1x2x128xf32>
    %15 = arith.addf %11, %14 : vector<1x2x128xf32>
    %c0_16 = arith.constant 0 : index
    %c0_17 = arith.constant 0 : index
    %c0_18 = arith.constant 0 : index
    %16 = vector.load %arg6[%c0_16, %c0_17, %c0_18] : memref<1x2x128xf32, #tpu.memory_space<vmem>>, vector<1x2x128xf32>
    tpu.vector_store %arg6[%c0_16, %c0_17, %c0_18], %15 {strides = array<i32>} : memref<1x2x128xf32, #tpu.memory_space<vmem>>, vector<1x2x128xf32>,
    return
  }
  func.func @transform_0(%arg0: i32, %arg1: i32, %arg2: i32) -> (i32, i32, i32) {
    %c1_i32 = arith.constant 1 : i32
    %0 = arith.muli %arg0, %c1_i32 : i32
    %1 = arith.addi %0, %arg2 : i32
    %c0_i32 = arith.constant 0 : i32
    %c0_i32_0 = arith.constant 0 : i32
    return %arg1, %1, %c0_i32 : i32, i32, i32
  }
  func.func @transform_1(%arg0: i32, %arg1: i32, %arg2: i32) -> (i32, i32, i32) {
    %c1_i32 = arith.constant 1 : i32
    %0 = arith.muli %arg0, %c1_i32 : i32
    %1 = arith.addi %0, %arg2 : i32
    %c0_i32 = arith.constant 0 : i32
    %c0_i32_0 = arith.constant 0 : i32
    return %arg1, %1, %c0_i32 : i32, i32, i32
  }
  func.func @transform_2(%arg0: i32, %arg1: i32, %arg2: i32) -> (i32, i32, i32) {
    %c0_i32 = arith.constant 0 : i32
    %c0_i32_0 = arith.constant 0 : i32
    return %arg0, %arg1, %c0_i32 : i32, i32, i32
  }
  func.func @transform_3(%arg0: i32, %arg1: i32, %arg2: i32) -> (i32, i32, i32) {
    %c0_i32 = arith.constant 0 : i32
    %c0_i32_0 = arith.constant 0 : i32
    return %arg0, %arg1, %c0_i32 : i32, i32, i32
  }
}

</mosaic_0001>

<llo_original>
// kernel: tpu_custom_call.1
$region0: #{tpu_custom_call.1}
  #allocation0 [shape = 'u32[]', space=smem, size = 0x4, offset = 0x4, fixed_abs, tag = 'smem constant byte address 0x4 - core index']
  #allocation1 [shape = 'u32[144,128]{1,0:T(1,128)}', space=vmem, size = 0x12000, scoped, tag = 'internal scratch']
  %s0 = inlined_call_operand.hbm [shape: f32[2,8,128], index: 0, kind: input, shape index: {}]
  %s1 = inlined_call_operand.hbm [shape: f32[2,8,128], index: 1, kind: input, shape index: {}]
  %s2 = inlined_call_operand.hbm [shape: f32[1,2,128], index: 2, kind: output, shape index: {0}]
  %s3 = inlined_call_operand.hbm [shape: f32[1,2,128], index: 3, kind: output, shape index: {1}]
  %4 = xla_tuple %s2, %s3
  %s5 = sld [smem:[#allocation0]]
  $region38: #{tpu_custom_call.1} parent=0
    _
  %s7 = ssub.s32 1, %s5
  %s8 = scalar_select 0, %s7, %s5
  $region1: #{tpu_custom_call.1} parent=0
    #allocation2 [shape = 'u8[8192]{0}', space=vmem, size = 0x2000, scoped, tag = 'input window, operand 0, single buffered']
    #allocation3 [shape = 's32[1]{0}', space=sflag, size = 0x4, scoped, tag = 'scoped memory for tpu_custom_call.1']
    #allocation4 [shape = 's32[1]{0}', space=sflag, size = 0x4, scoped, tag = 'scoped memory for tpu_custom_call.1']
    #allocation5 [shape = 'u8[8192]{0}', space=vmem, size = 0x2000, scoped, tag = 'input window, operand 1, single buffered']
    #allocation6 [shape = 's32[1]{0}', space=sflag, size = 0x4, scoped, tag = 'scoped memory for tpu_custom_call.1']
    #allocation7 [shape = 'u8[1024]{0}', space=vmem, size = 0x400, scoped, tag = 'output window, operand 0, single buffered']
    #allocation8 [shape = 'u8[1024]{0}', space=vmem, size = 0x400, scoped, tag = 'output window, operand 1, single buffered']
    #allocation9 [shape = 's32[1]{0}', space=sflag, size = 0x4, scoped, tag = 'scoped memory for tpu_custom_call.1']
    %9 = vsyncpa [#allocation3], 0
    %10 = vsyncpa [#allocation6], 0
    %11 = vsyncpa [#allocation4], 0
    %12 = vsyncpa [#allocation9], 0
    // Predicated region
    $region2: #{tpu_custom_call.1} parent=1 // pred_check
      _
    $region3: #{tpu_custom_call.1} parent=1 // pred_check_branch
      %14 = sbr.rel (0) target = $region5
    $region4: #{tpu_custom_call.1} parent=1 // pred_region
      %s15 = sadd.s32 0, 0
      %s17 = ssub.s32 256, 256
      %18 = vsyncadd [#allocation3], %s17
      %s19 = smul.addr %s15, 128
      %s20 = scalar_lea.hbm %s0, %s19
      %s21 = sshll.u32 [#allocation2], 4
      %s22 = int_to_ptr.vmem [resolvable:$true] %s21
      %27 = dma.hbm_to_vmem [thread:$0]  %s20, 256, %s22, [#allocation3], 128, 128, 8
    $region5: #{tpu_custom_call.1} parent=1 // pred_fallthru
      _
    // Predicated region
    $region6: #{tpu_custom_call.1} parent=1 // pred_check
      _
    $region7: #{tpu_custom_call.1} parent=1 // pred_check_branch
      %29 = sbr.rel (0) target = $region9
    $region8: #{tpu_custom_call.1} parent=1 // pred_region
      %s30 = sadd.s32 0, 0
      %s32 = ssub.s32 256, 256
      %33 = vsyncadd [#allocation6], %s32
      %s34 = smul.addr %s30, 128
      %s35 = scalar_lea.hbm %s1, %s34
      %s36 = sshll.u32 [#allocation5], 4
      %s37 = int_to_ptr.vmem [resolvable:$true] %s36
      %42 = dma.hbm_to_vmem [thread:$0]  %s35, 256, %s37, [#allocation6], 128, 128, 8
    $region9: #{tpu_custom_call.1} parent=1 // pred_fallthru
      _
    // Predicated region
    $region10: #{tpu_custom_call.1} parent=1 // pred_check
      _
    $region11: #{tpu_custom_call.1} parent=1 // pred_check_branch
      %44 = sbr.rel (0) target = $region13
    $region12: #{tpu_custom_call.1} parent=1 // pred_region
      %45 = dma.done [#allocation3], 256
    $region13: #{tpu_custom_call.1} parent=1 // pred_fallthru
      _
    // Predicated region
    $region14: #{tpu_custom_call.1} parent=1 // pred_check
      _
    $region15: #{tpu_custom_call.1} parent=1 // pred_check_branch
      %47 = sbr.rel (0) target = $region17
    $region16: #{tpu_custom_call.1} parent=1 // pred_region
      %48 = dma.done [#allocation6], 256
    $region17: #{tpu_custom_call.1} parent=1 // pred_fallthru
      _
    %s49 = sadd.s32 0, 0
    %s50 = sadd.s32 0, 0
    %p51 = scmp.eq.s32.totalorder 0, 0
    // Predicated region
    $region18: #{tpu_custom_call.1} parent=1 // pred_check
      %p52 = pneg %p51
    $region19: #{tpu_custom_call.1} parent=1 // pred_check_branch
      %54 = sbr.rel (%p52) target = $region21
    $region20: #{tpu_custom_call.1} parent=1 // pred_region
      %55 = vst [vmem:[#allocation7] sm:$0x3] 0.0
      %56 = vst [vmem:[#allocation8] sm:$0x3] 0.0
    $region21: #{tpu_custom_call.1} parent=1 // pred_fallthru
      _
    %v57 = vld [vmem:[#allocation2] sm:$0xff]
    %v58 = vld [vmem:[#allocation2 + $0x8] sm:$0xff]
    %v59 = vld [vmem:[#allocation5] sm:$0xff]
    %v60 = vld [vmem:[#allocation5 + $0x8] sm:$0xff]
    %v61 = vld [vmem:[#allocation7] sm:$0x3]
    %v62 = vmul.f32 %v57, %v59
    %v63 = vmul.f32 %v58, %v60
    %v64 = vrot.slane %v62, 4
    %v65 = vadd.f32 %v62, %v64
    %v66 = vrot.slane %v65, 2
    %v67 = vadd.f32 %v65, %v66
    %v68 = vrot.slane %v67, 1
    %v69 = vadd.f32 %v67, %v68
    %v70 = vrot.slane %v63, 4
    %v71 = vadd.f32 %v63, %v70
    %v72 = vrot.slane %v71, 2
    %v73 = vadd.f32 %v71, %v72
    %v74 = vrot.slane %v73, 1
    %v75 = vadd.f32 %v73, %v74
    %vm78 = vcmask 1041409
    %v79 = vsel %vm78, %v75, %v69
    %v81 = vadd.f32 %v61, %v79
    %82 = vst [vmem:[#allocation7] sm:$0x3] %v81
    %v83 = vld [vmem:[#allocation8] sm:$0x3]
    %v84 = vadd.f32 %v57, %v59
    %v85 = vadd.f32 %v58, %v60
    %v86 = vrot.slane %v84, 4
    %v87 = vadd.f32 %v84, %v86
    %v88 = vrot.slane %v87, 2
    %v89 = vadd.f32 %v87, %v88
    %v90 = vrot.slane %v89, 1
    %v91 = vadd.f32 %v89, %v90
    %v92 = vrot.slane %v85, 4
    %v93 = vadd.f32 %v85, %v92
    %v94 = vrot.slane %v93, 2
    %v95 = vadd.f32 %v93, %v94
    %v96 = vrot.slane %v95, 1
    %v97 = vadd.f32 %v95, %v96
    %v100 = vsel %vm78, %v97, %v91
    %v102 = vadd.f32 %v83, %v100
    %103 = vst [vmem:[#allocation8] sm:$0x3] %v102
    // Predicated region
    $region22: #{tpu_custom_call.1} parent=1 // pred_check
      _
    $region23: #{tpu_custom_call.1} parent=1 // pred_check_branch
      %105 = sbr.rel (0) target = $region25
    $region24: #{tpu_custom_call.1} parent=1 // pred_region
      %s107 = ssub.s32 32, 32
      %108 = vsyncadd [#allocation4], %s107
      %s110 = sshll.u32 [#allocation7], 4
      %s111 = int_to_ptr.vmem [resolvable:$true] %s110
      %113 = dma.vmem_to_hbm [thread:$0]  %s111, 32, %s2, [#allocation4]
    $region25: #{tpu_custom_call.1} parent=1 // pred_fallthru
      _
    // Predicated region
    $region26: #{tpu_custom_call.1} parent=1 // pred_check
      _
    $region27: #{tpu_custom_call.1} parent=1 // pred_check_branch
      %115 = sbr.rel (0) target = $region29
    $region28: #{tpu_custom_call.1} parent=1 // pred_region
      %s117 = ssub.s32 32, 32
      %118 = vsyncadd [#allocation9], %s117
      %s120 = sshll.u32 [#allocation8], 4
      %s121 = int_to_ptr.vmem [resolvable:$true] %s120
      %123 = dma.vmem_to_hbm [thread:$0]  %s121, 32, %s3, [#allocation9]
    $region29: #{tpu_custom_call.1} parent=1 // pred_fallthru
      _
    // Predicated region
    $region30: #{tpu_custom_call.1} parent=1 // pred_check
      _
    $region31: #{tpu_custom_call.1} parent=1 // pred_check_branch
      %125 = sbr.rel (0) target = $region33
    $region32: #{tpu_custom_call.1} parent=1 // pred_region
      %126 = dma.done [#allocation4], 32
    $region33: #{tpu_custom_call.1} parent=1 // pred_fallthru
      _
    // Predicated region
    $region34: #{tpu_custom_call.1} parent=1 // pred_check
      _
    $region35: #{tpu_custom_call.1} parent=1 // pred_check_branch
      %128 = sbr.rel (0) target = $region37
    $region36: #{tpu_custom_call.1} parent=1 // pred_region
      %129 = dma.done [#allocation9], 32
    $region37: #{tpu_custom_call.1} parent=1 // pred_fallthru
      _
    %130 = vsyncpa [#allocation3], 1
    %131 = vsyncpa [#allocation6], 1
    %132 = vsyncpa [#allocation4], 1
    %133 = vsyncpa [#allocation9], 1

</llo_original>
